<compile_context>
chip_gen: v7x
topology: tpu7x:2x2x1
jax: 0.10.0
libtpu: 0.0.40
codegen_flags: <defaults>
</compile_context>

<pallas_src>
import functools

import jax
import jax.numpy as jnp
from jax.experimental import pallas as pl
from jax.experimental.pallas import tpu as pltpu


def _adanorm_kernel(x_ref, o_ref, *, eps: float, scale: float):
    x = x_ref[...].astype(jnp.float32)          # (block_rows, H), f32 accumulate
    h = x.shape[-1]

    mean = jnp.mean(x, axis=-1, keepdims=True)
    xc = x - mean
    # torch.std default is unbiased (divide by N-1); guard H == 1.
    inv_n = jnp.float32(1.0 / max(h - 1, 1))
    var = jnp.sum(xc * xc, axis=-1, keepdims=True) * inv_n
    std = jnp.sqrt(var)

    # Single exact reciprocal (keeps 1e-5 parity with the torch reference),
    # then the algebraically folded form: y*(1 - 0.1*y).
    inv = 1.0 / (std + jnp.float32(eps))
    y = xc * inv
    o_ref[...] = (y * (1.0 - 0.1 * y) * jnp.float32(scale)).astype(o_ref.dtype)


def _sublane_multiple(dtype) -> int:
    # Sub-32-bit dtypes pack along sublanes: f32 -> 8, bf16 -> 16, int8/fp8 -> 32.
    itemsize = jnp.dtype(dtype).itemsize
    return max(8, 32 // itemsize)


def _vmem_block_budget_bytes() -> int:
    # Per-generation VMEM capacity (128 MiB v5e/v6e, 64 MiB per-TC v7x).
    try:
        cap = pltpu.get_tpu_info().vmem_capacity_bytes
    except Exception:
        cap = 128 * 1024 * 1024
    # Budget for all pipeline buffers: in + out, double-buffered = 4 resident
    # blocks. Use a quarter of physical VMEM so there is comfortable headroom.
    return cap // 4


def adanorm(x, adanorm_scale: float = 1.0, eps: float = 1e-5,
            block_rows: int | None = None):
    """AdaNorm forward over the last axis of x (any leading shape)."""
    orig_shape = x.shape
    h = orig_shape[-1]
    x2 = x.reshape(-1, h)
    r = x2.shape[0]

    itemsize = jnp.dtype(x.dtype).itemsize
    sub = _sublane_multiple(x.dtype)

    if block_rows is None:
        # Largest row block (multiple of the sublane packing) such that
        # 4 blocks (in + out, double-buffered) fit the per-generation budget.
        budget = _vmem_block_budget_bytes()
        br = budget // (4 * h * itemsize)
        br = max(sub, (br // sub) * sub)
    else:
        br = block_rows

    if br >= r:
        br = r  # single full-extent block (equals full array dim -> legal)

    grid = (pl.cdiv(r, br),)  # ragged last block handled by Pallas; the
    # reduction is over H only, so padded rows never contaminate valid rows.

    # Size the scoped-VMEM limit to the actual pipeline footprint + headroom.
    vmem_limit = int(4 * br * h * itemsize + (8 << 20))

    kernel = functools.partial(_adanorm_kernel, eps=eps, scale=adanorm_scale)

    out2 = pl.pallas_call(
        kernel,
        out_shape=jax.ShapeDtypeStruct((r, h), x.dtype),
        grid_spec=pltpu.PrefetchScalarGridSpec(
            num_scalar_prefetch=0,
            grid=grid,
            in_specs=[pl.BlockSpec((br, h), lambda i: (i, 0))],
            out_specs=pl.BlockSpec((br, h), lambda i: (i, 0)),
        ),
        compiler_params=pltpu.CompilerParams(
            dimension_semantics=("parallel",),   # megacore-shardable grid
            vmem_limit_bytes=vmem_limit,
        ),
    )(x2)

    return out2.reshape(orig_shape)


def adanorm_ref(x, adanorm_scale: float = 1.0, eps: float = 1e-5):
    """Pure-JAX reference mirroring the PyTorch module."""
    xf = x.astype(jnp.float32)
    mean = jnp.mean(xf, axis=-1, keepdims=True)
    xc = xf - mean
    var = jnp.sum(xc * xc, axis=-1, keepdims=True) / max(xf.shape[-1] - 1, 1)
    std = jnp.sqrt(var)
    gra = 0.1 * xc / (std + eps)
    return (((xc - xc * gra) / (std + eps)) * adanorm_scale).astype(x.dtype)


if __name__ == "__main__":
    key = jax.random.PRNGKey(0)

    # (batch, seq, hidden) — reduction over hidden (last dim).
    x = jax.random.normal(key, (2, 8, 32), dtype=jnp.float32)
    out = adanorm(x, adanorm_scale=1.0, eps=1e-5)
    out = jax.block_until_ready(out)
    ref = adanorm_ref(x, adanorm_scale=1.0, eps=1e-5)
    assert out.shape == x.shape
    assert jnp.allclose(out, ref, atol=1e-5, rtol=1e-5)

    # Ragged-row case exercising the cdiv grid (R = 15 not divisible by 8).
    x2 = jax.random.normal(jax.random.PRNGKey(1), (3, 5, 32), dtype=jnp.float32)
    out2 = adanorm(x2, adanorm_scale=0.5, eps=1e-5, block_rows=8)
    out2 = jax.block_until_ready(out2)
    ref2 = adanorm_ref(x2, adanorm_scale=0.5, eps=1e-5)
    assert jnp.allclose(out2, ref2, atol=1e-5, rtol=1e-5)

    print("KERNEL_OK")
</pallas_src>

<mosaic_0001>
module attributes {stable_mosaic.version = 11 : i64} {
  func.func @_adanorm_kernel(%arg0: i32, %arg1: memref<16x32xf32, #tpu.memory_space<vmem>>, %arg2: memref<16x32xf32, #tpu.memory_space<vmem>>) attributes {dimension_semantics = [#tpu.dimension_semantics<parallel>], iteration_bounds = array<i64: 1>, scalar_prefetch = 0 : i64, scratch_operands = 0 : i64, tpu.core_type = #tpu.core_type<tc>, window_params = [{transform_indices = @transform_0, window_bounds = array<i64: 16, 32>}, {transform_indices = @transform_1, window_bounds = array<i64: 16, 32>}]} {
    %c0 = arith.constant 0 : index
    %c0_0 = arith.constant 0 : index
    %0 = vector.load %arg1[%c0, %c0_0] : memref<16x32xf32, #tpu.memory_space<vmem>>, vector<16x32xf32>
    %cst = arith.constant dense<0.000000e+00> : vector<16xf32>
    %1 = vector.multi_reduction <add>, %0, %cst [1] : vector<16x32xf32> to vector<16xf32>
    %2 = vector.shape_cast %1 : vector<16xf32> to vector<16x1xf32>
    %cst_1 = arith.constant 3.200000e+01 : f32
    %3 = vector.broadcast %cst_1 : f32 to vector<16x1xf32>
    %4 = arith.divf %2, %3 : vector<16x1xf32>
    %5 = vector.broadcast %4 : vector<16x1xf32> to vector<16x32xf32>
    %6 = arith.subf %0, %5 : vector<16x32xf32>
    %7 = arith.mulf %6, %6 : vector<16x32xf32>
    %cst_2 = arith.constant dense<0.000000e+00> : vector<16xf32>
    %8 = vector.multi_reduction <add>, %7, %cst_2 [1] : vector<16x32xf32> to vector<16xf32>
    %9 = vector.shape_cast %8 : vector<16xf32> to vector<16x1xf32>
    %cst_3 = arith.constant 0.0322580636 : f32
    %10 = vector.broadcast %cst_3 : f32 to vector<16x1xf32>
    %11 = arith.mulf %9, %10 : vector<16x1xf32>
    %12 = math.sqrt %11 : vector<16x1xf32>
    %cst_4 = arith.constant 9.99999974E-6 : f32
    %13 = vector.broadcast %cst_4 : f32 to vector<16x1xf32>
    %14 = arith.addf %12, %13 : vector<16x1xf32>
    %cst_5 = arith.constant 1.000000e+00 : f32
    %15 = vector.broadcast %cst_5 : f32 to vector<16x1xf32>
    %16 = arith.divf %15, %14 : vector<16x1xf32>
    %17 = vector.broadcast %16 : vector<16x1xf32> to vector<16x32xf32>
    %18 = arith.mulf %6, %17 : vector<16x32xf32>
    %cst_6 = arith.constant 1.000000e-01 : f32
    %19 = vector.broadcast %cst_6 : f32 to vector<16x32xf32>
    %20 = arith.mulf %19, %18 : vector<16x32xf32>
    %cst_7 = arith.constant 1.000000e+00 : f32
    %21 = vector.broadcast %cst_7 : f32 to vector<16x32xf32>
    %22 = arith.subf %21, %20 : vector<16x32xf32>
    %23 = arith.mulf %18, %22 : vector<16x32xf32>
    %cst_8 = arith.constant 1.000000e+00 : f32
    %24 = vector.broadcast %cst_8 : f32 to vector<16x32xf32>
    %25 = arith.mulf %23, %24 : vector<16x32xf32>
    %c0_9 = arith.constant 0 : index
    %c0_10 = arith.constant 0 : index
    %26 = vector.load %arg2[%c0_9, %c0_10] : memref<16x32xf32, #tpu.memory_space<vmem>>, vector<16x32xf32>
    tpu.vector_store %arg2[%c0_9, %c0_10], %25 {strides = array<i32>} : memref<16x32xf32, #tpu.memory_space<vmem>>, vector<16x32xf32>,
    return
  }
  func.func @transform_0(%arg0: i32) -> (i32, i32) {
    %c0_i32 = arith.constant 0 : i32
    %c0_i32_0 = arith.constant 0 : i32
    return %arg0, %c0_i32 : i32, i32
  }
  func.func @transform_1(%arg0: i32) -> (i32, i32) {
    %c0_i32 = arith.constant 0 : i32
    %c0_i32_0 = arith.constant 0 : i32
    return %arg0, %c0_i32 : i32, i32
  }
}

</mosaic_0001>

<llo_original>
// kernel: tpu_custom_call.1
$region0: #{tpu_custom_call.1}
  #allocation0 [shape = 'u32[]', space=smem, size = 0x4, offset = 0x4, fixed_abs, tag = 'smem constant byte address 0x4 - core index']
  #allocation1 [shape = 'u32[144,128]{1,0:T(1,128)}', space=vmem, size = 0x12000, scoped, tag = 'internal scratch']
  %s0 = inlined_call_operand.hbm [shape: f32[16,32], index: 0, kind: input, shape index: {}]
  %s1 = inlined_call_operand.hbm [shape: f32[16,32], index: 1, kind: output, shape index: {}]
  %s2 = sld [smem:[#allocation0]]
  $region18: #{tpu_custom_call.1} parent=0
    _
  %s4 = ssub.s32 1, %s2
  %s5 = scalar_select 0, %s4, %s2
  $region1: #{tpu_custom_call.1} parent=0
    #allocation2 [shape = 'u8[8192]{0}', space=vmem, size = 0x2000, scoped, tag = 'input window, operand 0, single buffered']
    #allocation3 [shape = 's32[1]{0}', space=sflag, size = 0x4, scoped, tag = 'scoped memory for tpu_custom_call.1']
    #allocation4 [shape = 's32[1]{0}', space=sflag, size = 0x4, scoped, tag = 'scoped memory for tpu_custom_call.1']
    #allocation5 [shape = 'u8[8192]{0}', space=vmem, size = 0x2000, scoped, tag = 'output window, operand 0, single buffered']
    %6 = vsyncpa [#allocation3], 0
    %7 = vsyncpa [#allocation4], 0
    // Predicated region
    $region2: #{tpu_custom_call.1} parent=1 // pred_check
      _
    $region3: #{tpu_custom_call.1} parent=1 // pred_check_branch
      %9 = sbr.rel (0) target = $region5
    $region4: #{tpu_custom_call.1} parent=1 // pred_region
      %s11 = ssub.s32 256, 256
      %12 = vsyncadd [#allocation3], %s11
      %s13 = sshll.u32 [#allocation2], 4
      %s14 = int_to_ptr.vmem [resolvable:$true] %s13
      %19 = dma.hbm_to_vmem [thread:$0]  %s0, 256, %s14, [#allocation3], 128, 128, 8
    $region5: #{tpu_custom_call.1} parent=1 // pred_fallthru
      _
    // Predicated region
    $region6: #{tpu_custom_call.1} parent=1 // pred_check
      _
    $region7: #{tpu_custom_call.1} parent=1 // pred_check_branch
      %21 = sbr.rel (0) target = $region9
    $region8: #{tpu_custom_call.1} parent=1 // pred_region
      %22 = dma.done [#allocation3], 256
    $region9: #{tpu_custom_call.1} parent=1 // pred_fallthru
      _
    %v23 = vld [vmem:[#allocation2] sm:$0xff]
    %v24 = vld [vmem:[#allocation2 + $0x8] sm:$0xff]
    %vm25 = vcmask 261120
    %v26 = vsel %vm25, %v23, 0.0
    %27 = vadd.xlane.f32.xlu0 %v26
    %v28 = vpop.xlane.xlu0 %27
    %v29 = vsel %vm25, %v24, 0.0
    %30 = vadd.xlane.f32.xlu0 %v29
    %v31 = vpop.xlane.xlu0 %30
    %v32 = vrcp.pop 32.0
    %v33 = vmul.f32 %v28, %v32
    %v34 = vmul.f32 %v31, %v32
    %v35 = vsub.f32 %v23, %v33
    %v36 = vsub.f32 %v24, %v34
    %v37 = vmul.f32 %v35, %v35
    %v38 = vmul.f32 %v36, %v36
    %v39 = vsel %vm25, %v37, 0.0
    %40 = vadd.xlane.f32.xlu0 %v39
    %v41 = vpop.xlane.xlu0 %40
    %v42 = vsel %vm25, %v38, 0.0
    %43 = vadd.xlane.f32.xlu0 %v42
    %v44 = vpop.xlane.xlu0 %43
    %v45 = vmul.f32 %v41, 0.032258064
    %v46 = vmul.f32 %v44, 0.032258064
    %v47 = vrsqrt.pop %v45
    %v48 = vmul.f32 %v45, %v47
    %vm49 = vcmp.eq.f32.partialorder %v45, inf
    %v50 = vsel %vm49, %v45, %v48
    %vm51 = vcmp.eq.f32.partialorder %v45, 0.0
    %v52 = vand.u32 %v45, 2147483648
    %v53 = vsel %vm51, %v52, %v50
    %v54 = vrsqrt.pop %v46
    %v55 = vmul.f32 %v46, %v54
    %vm56 = vcmp.eq.f32.partialorder %v46, inf
    %v57 = vsel %vm56, %v46, %v55
    %vm58 = vcmp.eq.f32.partialorder %v46, 0.0
    %v59 = vand.u32 %v46, 2147483648
    %v60 = vsel %vm58, %v59, %v57
    %v61 = vadd.f32 %v53, 1e-05
    %v62 = vadd.f32 %v60, 1e-05
    %v63 = vrcp.pop %v61
    %v64 = vmul.f32 1.0, %v63
    %v65 = vrcp.pop %v62
    %v66 = vmul.f32 1.0, %v65
    %v67 = vmul.f32 %v35, %v64
    %v68 = vmul.f32 %v36, %v66
    %v69 = vmul.f32 %v67, 0.1
    %v70 = vmul.f32 %v68, 0.1
    %v71 = vsub.f32 1.0, %v69
    %v72 = vsub.f32 1.0, %v70
    %v73 = vmul.f32 %v67, %v71
    %v74 = vmul.f32 %v68, %v72
    %75 = vst.msk [vmem:[#allocation5] sm:$0xff] %vm25, %v73
    %76 = vst.msk [vmem:[#allocation5 + $0x8] sm:$0xff] %vm25, %v74
    // Predicated region
    $region10: #{tpu_custom_call.1} parent=1 // pred_check
      _
    $region11: #{tpu_custom_call.1} parent=1 // pred_check_branch
      %78 = sbr.rel (0) target = $region13
    $region12: #{tpu_custom_call.1} parent=1 // pred_region
      %s80 = ssub.s32 256, 256
      %81 = vsyncadd [#allocation4], %s80
      %s82 = sshll.u32 [#allocation5], 4
      %s83 = int_to_ptr.vmem [resolvable:$true] %s82
      %88 = dma.vmem_to_hbm [thread:$0]  %s83, 256, %s1, [#allocation4], 128, 128, 8
    $region13: #{tpu_custom_call.1} parent=1 // pred_fallthru
      _
    // Predicated region
    $region14: #{tpu_custom_call.1} parent=1 // pred_check
      _
    $region15: #{tpu_custom_call.1} parent=1 // pred_check_branch
      %90 = sbr.rel (0) target = $region17
    $region16: #{tpu_custom_call.1} parent=1 // pred_region
      %91 = dma.done [#allocation4], 256
    $region17: #{tpu_custom_call.1} parent=1 // pred_fallthru
      _
    %92 = vsyncpa [#allocation3], 1
    %93 = vsyncpa [#allocation4], 1

</llo_original>
